<compile_context>
chip_gen: v7x
topology: tpu7x:2x2x1
jax: 0.10.0
libtpu: 0.0.40
codegen_flags: <defaults>
</compile_context>

<pallas_src>
import functools
import math

import jax
import jax.numpy as jnp
from jax.experimental import pallas as pl
from jax.experimental.pallas import tpu as pltpu


_LOG_CLAMP_MIN = math.log(1e-7)  # clamp(min=1e-7) expressed in log-space


def _cdiv(a, b):
    return -(-a // b)


def _round_up(a, b):
    return _cdiv(a, b) * b


def _gce_kernel(pred_ref, lab_ref, out_ref, *, q, n_valid, tile_n, bf16_exp):
    # pred_ref: (C, tile_n) logits (samples on lanes), lab_ref: (1, tile_n) int32,
    # out_ref: (1, 128) — partial loss sum for this tile goes in lane 0.
    i = pl.program_id(0)

    x = pred_ref[...].astype(jnp.float32)                       # (C, tn)
    num_classes, tn = x.shape
    labels = lab_ref[...]                                       # (1, tn)

    # log-softmax normalizer over the class (sublane) axis.
    m = jnp.max(x, axis=0, keepdims=True)                       # (1, tn)
    xm = x - m
    if bf16_exp:
        # v7x (EUP-bound) option: bf16 exp is ~2x the f32 EUP rate. Small,
        # quantifiable accuracy cost; leave off for exact-f32 behaviour.
        e = jnp.exp(xm.astype(jnp.bfloat16)).astype(jnp.float32)
    else:
        e = jnp.exp(xm)
    s = jnp.sum(e, axis=0, keepdims=True)                       # (1, tn)
    log_z = m + jnp.log(s)                                      # (1, tn)

    # Gather the labelled-class logit with a one-hot sublane reduce.
    class_ids = jax.lax.broadcasted_iota(jnp.int32, (num_classes, tn), 0)
    onehot = (class_ids == labels).astype(jnp.float32)          # (C, tn)
    x_label = jnp.sum(onehot * x, axis=0, keepdims=True)        # (1, tn)

    # log p_label clamped at log(1e-7); the upper clamp to 1.0 is a no-op
    # since log p_label <= 0.  Yg**q = exp(q * log p_label).
    log_p = jnp.maximum(x_label - log_z, jnp.float32(_LOG_CLAMP_MIN))
    yg_q = jnp.exp(jnp.float32(q) * log_p)                      # (1, tn)
    loss = (1.0 - yg_q) * jnp.float32(1.0 / q)                  # (1, tn)

    # Ragged-tail mask: columns >= n_valid are out-of-bounds (undefined DMA
    # data, possibly NaN/Inf) — select them to zero before reducing.
    col = jax.lax.broadcasted_iota(jnp.int32, (1, tn), 1) + i * tile_n
    loss = jnp.where(col < n_valid, loss, 0.0)

    partial = jnp.sum(loss, axis=1, keepdims=True)              # (1, 1)
    lane = jax.lax.broadcasted_iota(jnp.int32, (1, 128), 1)
    out_ref[...] = jnp.where(lane == 0, partial, 0.0)


def gce_loss_t(pred_t, labels, *, q=0.7, tile_n=32768, bf16_exp=False):
    """GCE loss from class-major logits (zero-copy fast path).

    pred_t: (C, N) float (f32 or bf16) — samples on the fast lane axis.
    labels: (N,) int.
    Returns a float32 scalar.
    """
    C, N = pred_t.shape

    # Tile selection: multiples of 128 lanes, capped by the problem size and
    # a VMEM-friendly upper bound; load-balanced across tiles.  A single-tile
    # problem is split in two so both v7x TensorCores get work ("parallel").
    n128 = _round_up(N, 128)
    tile = _round_up(max(128, min(int(tile_n), n128, 1 << 17)), 128)
    num_tiles = _cdiv(n128, tile)
    if num_tiles == 1 and n128 >= 256:
        num_tiles = 2
    tile = _round_up(_cdiv(n128, num_tiles), 128)
    num_tiles = _cdiv(n128, tile)

    labels2d = labels.reshape(1, N).astype(jnp.int32)   # free reshape, no copy

    kernel = functools.partial(
        _gce_kernel, q=float(q), n_valid=N, tile_n=tile, bf16_exp=bf16_exp)

    partials = pl.pallas_call(
        kernel,
        out_shape=jax.ShapeDtypeStruct((1, num_tiles * 128), jnp.float32),
        grid=(num_tiles,),
        in_specs=[
            pl.BlockSpec((C, tile), lambda i: (0, i)),
            pl.BlockSpec((1, tile), lambda i: (0, i)),
        ],
        out_specs=pl.BlockSpec((1, 128), lambda i: (0, i)),
        compiler_params=pltpu.CompilerParams(
            dimension_semantics=("parallel",),
            vmem_limit_bytes=32 * 1024 * 1024,
        ),
    )(pred_t, labels2d)

    # Tiny epilogue: only lane 0 of each 128-lane slot is non-zero.
    return jnp.sum(partials) / jnp.float32(N)


def gce_loss(pred, labels, *, q=0.7, tile_n=32768, bf16_exp=False):
    """GCE loss matching the PyTorch module. pred: (N, C) logits, labels: (N,)."""
    # The kernel wants class-major (C, N).  This plain transpose is the only
    # wrapper-side data movement (no zeros+scatter); if the producing matmul
    # can emit logits as (C, N), call gce_loss_t directly and it disappears.
    return gce_loss_t(pred.T, labels, q=q, tile_n=tile_n, bf16_exp=bf16_exp)


def gce_loss_ref(pred, labels, *, q=0.7):
    """Pure-JAX reference mirroring the PyTorch module."""
    p = jax.nn.softmax(pred.astype(jnp.float32), axis=1)
    p = jnp.clip(p, 1e-07, 1.0)
    yg = jnp.take_along_axis(p, labels.astype(jnp.int32)[:, None], axis=1)[:, 0]
    return jnp.mean((1.0 - yg ** q) / q)


if __name__ == "__main__":
    num_classes = 10
    q = 0.7

    key = jax.random.PRNGKey(0)

    # Case 1: N not a multiple of 128 — exercises the in-kernel tail mask and
    # the two-tile (megacore) split.
    N1 = 200
    k1, k2, k3, k4 = jax.random.split(key, 4)
    pred1 = jax.random.normal(k1, (N1, num_classes), dtype=jnp.float32) * 3.0
    lab1 = jax.random.randint(k2, (N1,), 0, num_classes, dtype=jnp.int32)
    out1 = jax.block_until_ready(gce_loss(pred1, lab1, q=q))
    ref1 = jax.block_until_ready(gce_loss_ref(pred1, lab1, q=q))
    assert jnp.allclose(out1, ref1, rtol=1e-5, atol=1e-6), (out1, ref1)

    # Case 2: larger N — exercises multi-tile grid with balanced tiles.
    N2 = 1000
    pred2 = jax.random.normal(k3, (N2, num_classes), dtype=jnp.float32) * 3.0
    lab2 = jax.random.randint(k4, (N2,), 0, num_classes, dtype=jnp.int32)
    out2 = jax.block_until_ready(gce_loss(pred2, lab2, q=q))
    ref2 = jax.block_until_ready(gce_loss_ref(pred2, lab2, q=q))
    assert jnp.allclose(out2, ref2, rtol=1e-5, atol=1e-6), (out2, ref2)

    print("KERNEL_OK")
</pallas_src>

<mosaic_0001>
module attributes {stable_mosaic.version = 11 : i64} {
  func.func @_gce_kernel(%arg0: i32, %arg1: memref<10x128xf32, #tpu.memory_space<vmem>>, %arg2: memref<1x128xi32, #tpu.memory_space<vmem>>, %arg3: memref<1x128xf32, #tpu.memory_space<vmem>>) attributes {dimension_semantics = [#tpu.dimension_semantics<parallel>], iteration_bounds = array<i64: 2>, scalar_prefetch = 0 : i64, scratch_operands = 0 : i64, tpu.core_type = #tpu.core_type<tc>, window_params = [{transform_indices = @transform_0, window_bounds = array<i64: 10, 128>}, {transform_indices = @transform_1, window_bounds = array<i64: 1, 128>}, {transform_indices = @transform_2, window_bounds = array<i64: 1, 128>}]} {
    %c0 = arith.constant 0 : index
    %c0_0 = arith.constant 0 : index
    %0 = vector.load %arg1[%c0, %c0_0] : memref<10x128xf32, #tpu.memory_space<vmem>>, vector<10x128xf32>
    %c0_1 = arith.constant 0 : index
    %c0_2 = arith.constant 0 : index
    %1 = vector.load %arg2[%c0_1, %c0_2] : memref<1x128xi32, #tpu.memory_space<vmem>>, vector<1x128xi32>
    %cst = arith.constant dense<0xFF800000> : vector<128xf32>
    %2 = vector.multi_reduction <maximumf>, %0, %cst [0] : vector<10x128xf32> to vector<128xf32>
    %3 = vector.shape_cast %2 : vector<128xf32> to vector<1x128xf32>
    %4 = vector.broadcast %3 : vector<1x128xf32> to vector<10x128xf32>
    %5 = arith.subf %0, %4 : vector<10x128xf32>
    %6 = math.exp %5 : vector<10x128xf32>
    %cst_3 = arith.constant dense<0.000000e+00> : vector<128xf32>
    %7 = vector.multi_reduction <add>, %6, %cst_3 [0] : vector<10x128xf32> to vector<128xf32>
    %8 = vector.shape_cast %7 : vector<128xf32> to vector<1x128xf32>
    %9 = math.log %8 : vector<1x128xf32>
    %10 = arith.addf %3, %9 : vector<1x128xf32>
    %11 = tpu.iota {dimensions = array<i32: 0>} : vector<10x128xi32>
    %12 = vector.broadcast %1 : vector<1x128xi32> to vector<10x128xi32>
    %13 = arith.cmpi eq, %11, %12 : vector<10x128xi32>
    %14 = arith.extui %13 : vector<10x128xi1> to vector<10x128xi32>
    %15 = arith.sitofp %14 : vector<10x128xi32> to vector<10x128xf32>
    %16 = arith.mulf %15, %0 : vector<10x128xf32>
    %cst_4 = arith.constant dense<0.000000e+00> : vector<128xf32>
    %17 = vector.multi_reduction <add>, %16, %cst_4 [0] : vector<10x128xf32> to vector<128xf32>
    %18 = vector.shape_cast %17 : vector<128xf32> to vector<1x128xf32>
    %19 = arith.subf %18, %10 : vector<1x128xf32>
    %cst_5 = arith.constant -16.1180954 : f32
    %20 = vector.broadcast %cst_5 : f32 to vector<1x128xf32>
    %21 = arith.maximumf %19, %20 : vector<1x128xf32>
    %cst_6 = arith.constant 0.699999988 : f32
    %22 = vector.broadcast %cst_6 : f32 to vector<1x128xf32>
    %23 = arith.mulf %22, %21 : vector<1x128xf32>
    %24 = math.exp %23 : vector<1x128xf32>
    %cst_7 = arith.constant 1.000000e+00 : f32
    %25 = vector.broadcast %cst_7 : f32 to vector<1x128xf32>
    %26 = arith.subf %25, %24 : vector<1x128xf32>
    %cst_8 = arith.constant 1.42857146 : f32
    %27 = vector.broadcast %cst_8 : f32 to vector<1x128xf32>
    %28 = arith.mulf %26, %27 : vector<1x128xf32>
    %29 = tpu.iota {dimensions = array<i32: 1>} : vector<1x128xi32>
    %c128_i32 = arith.constant 128 : i32
    %30 = arith.muli %arg0, %c128_i32 : i32
    %31 = vector.broadcast %30 : i32 to vector<1x128xi32>
    %32 = arith.addi %29, %31 : vector<1x128xi32>
    %c200_i32 = arith.constant 200 : i32
    %33 = vector.broadcast %c200_i32 : i32 to vector<1x128xi32>
    %34 = arith.cmpi slt, %32, %33 : vector<1x128xi32>
    %cst_9 = arith.constant 0.000000e+00 : f32
    %35 = vector.broadcast %cst_9 : f32 to vector<1x128xf32>
    %36 = arith.select %34, %28, %35 : vector<1x128xi1>, vector<1x128xf32>
    %cst_10 = arith.constant dense<0.000000e+00> : vector<1xf32>
    %37 = vector.multi_reduction <add>, %36, %cst_10 [1] : vector<1x128xf32> to vector<1xf32>
    %38 = vector.shape_cast %37 : vector<1xf32> to vector<1x1xf32>
    %39 = tpu.iota {dimensions = array<i32: 1>} : vector<1x128xi32>
    %c0_i32 = arith.constant 0 : i32
    %40 = vector.broadcast %c0_i32 : i32 to vector<1x128xi32>
    %41 = arith.cmpi eq, %39, %40 : vector<1x128xi32>
    %cst_11 = arith.constant 0.000000e+00 : f32
    %42 = vector.shape_cast %38 : vector<1x1xf32> to vector<1x1xf32>
    %43 = vector.broadcast %42 : vector<1x1xf32> to vector<1x128xf32>
    %44 = vector.broadcast %cst_11 : f32 to vector<1x128xf32>
    %45 = arith.select %41, %43, %44 : vector<1x128xi1>, vector<1x128xf32>
    %c0_12 = arith.constant 0 : index
    %c0_13 = arith.constant 0 : index
    %46 = vector.load %arg3[%c0_12, %c0_13] : memref<1x128xf32, #tpu.memory_space<vmem>>, vector<1x128xf32>
    tpu.vector_store %arg3[%c0_12, %c0_13], %45 {strides = array<i32>} : memref<1x128xf32, #tpu.memory_space<vmem>>, vector<1x128xf32>,
    return
  }
  func.func @transform_0(%arg0: i32) -> (i32, i32) {
    %c0_i32 = arith.constant 0 : i32
    %c0_i32_0 = arith.constant 0 : i32
    return %c0_i32, %arg0 : i32, i32
  }
  func.func @transform_1(%arg0: i32) -> (i32, i32) {
    %c0_i32 = arith.constant 0 : i32
    %c0_i32_0 = arith.constant 0 : i32
    return %c0_i32, %arg0 : i32, i32
  }
  func.func @transform_2(%arg0: i32) -> (i32, i32) {
    %c0_i32 = arith.constant 0 : i32
    %c0_i32_0 = arith.constant 0 : i32
    return %c0_i32, %arg0 : i32, i32
  }
}

</mosaic_0001>

<llo_original>
// kernel: tpu_custom_call.1
$region0: #{tpu_custom_call.1}
  #allocation0 [shape = 'u32[]', space=smem, size = 0x4, offset = 0x4, fixed_abs, tag = 'smem constant byte address 0x4 - core index']
  #allocation1 [shape = 'u32[144,128]{1,0:T(1,128)}', space=vmem, size = 0x12000, scoped, tag = 'internal scratch']
  %s0 = inlined_call_operand.hbm [shape: f32[10,200], index: 0, kind: input, shape index: {}]
  %s1 = inlined_call_operand.vmem [shape: s32[1,200], index: 1, kind: input, shape index: {}]
  %s2 = inlined_call_operand.hbm [shape: f32[1,256], index: 2, kind: output, shape index: {}]
  %s3 = sld [smem:[#allocation0]]
  $region45: #{tpu_custom_call.1} parent=0
    _
  %s5 = ssub.s32 1, %s3
  %s6 = scalar_select 0, %s5, %s3
  $region1: #{tpu_custom_call.1} parent=0
    #allocation2 [shape = 'u8[16384]{0}', space=vmem, size = 0x4000, scoped, tag = 'input window, operand 0']
    #allocation3 [shape = 's32[2]{0}', space=sflag, size = 0x8, scoped, tag = 'scoped memory for tpu_custom_call.1']
    #allocation4 [shape = 's32[2]{0}', space=sflag, size = 0x8, scoped, tag = 'scoped memory for tpu_custom_call.1']
    #allocation5 [shape = 'u8[1024]{0}', space=vmem, size = 0x400, scoped, tag = 'output window, operand 0']
    %7 = vsyncpa [#allocation3], 0
    %s8 = scalar_lea.sflag [#allocation3], 1
    %9 = vsyncpa %s8, 0
    %10 = vsyncpa [#allocation4], 0
    %s11 = scalar_lea.sflag [#allocation4], 1
    %12 = vsyncpa %s11, 0
    loop: start=0, step=1, limit=4
    $region2: #{tpu_custom_call.1} parent=1 // loop_pre_header
      _
    $region3: #{tpu_custom_call.1} parent=1 // loop_header
      %s14 = sphi 0, %s18
      %p15 = scmp.ge.s32.totalorder %s14, 4
      %s24 = sphi 0, %s26
      %s27 = sphi 0, %s24
      %s28 = sphi 0, %s27
      %s44 = sphi 0, %s28
      %s50 = sphi 0, %s52
      %s53 = sphi 0, %s50
      %s54 = sphi 0, %s53
      %s70 = sphi 0, %s54
      %s76 = sphi 0, %s78
      %s79 = sphi 0, %s76
      %s80 = sphi 0, %s79
      %s96 = sphi 0, %s80
    $region4: #{tpu_custom_call.1} parent=1 // loop_header_branch
      %17 = sbr.rel (%p15) target = $region8
    $region5: #{tpu_custom_call.1} parent=1 // loop_body
      %s19 = ssub.s32 %s14, 1
      %s20 = ssub.s32 %s14, 2
      %s21 = sadd.s32 %s14, 1
      %s22 = ssub.s32 %s14, %s21
      %p23 = scmp.eq.s32.totalorder %s22, 0
      %s25 = sadd.s32 %s24, 1
      %s26 = scalar_select %p23, %s24, %s25
      %p29 = pneg %p23
      %p30 = scmp.eq.s32.totalorder %s14, 1
      %p31 = por %p29, %p30
      %p32 = scmp.ne.s32.totalorder %s24, %s27
      %p33 = scmp.eq.s32.totalorder %s14, 0
      %p34 = por %p32, %p33
      %p35 = scmp.ne.s32.totalorder %s24, %s27
      %p36 = scmp.eq.s32.totalorder %s19, 1
      %p37 = por %p35, %p36
      %p38 = scmp.ne.s32.totalorder %s27, %s28
      %p39 = scmp.eq.s32.totalorder %s19, 0
      %p40 = por %p38, %p39
      %p41 = scmp.ne.s32.totalorder %s27, %s28
      %p42 = scmp.eq.s32.totalorder %s20, 1
      %p43 = por %p41, %p42
      %p45 = scmp.ne.s32.totalorder %s28, %s44
      %p46 = scmp.eq.s32.totalorder %s20, 0
      %p47 = por %p45, %p46
      %s48 = ssub.s32 %s14, %s21
      %p49 = scmp.eq.s32.totalorder %s48, 0
      %s51 = sadd.s32 %s50, 1
      %s52 = scalar_select %p49, %s50, %s51
      %p55 = pneg %p49
      %p56 = scmp.eq.s32.totalorder %s14, 1
      %p57 = por %p55, %p56
      %p58 = scmp.ne.s32.totalorder %s50, %s53
      %p59 = scmp.eq.s32.totalorder %s14, 0
      %p60 = por %p58, %p59
      %p61 = scmp.ne.s32.totalorder %s50, %s53
      %p62 = scmp.eq.s32.totalorder %s19, 1
      %p63 = por %p61, %p62
      %p64 = scmp.ne.s32.totalorder %s53, %s54
      %p65 = scmp.eq.s32.totalorder %s19, 0
      %p66 = por %p64, %p65
      %p67 = scmp.ne.s32.totalorder %s53, %s54
      %p68 = scmp.eq.s32.totalorder %s20, 1
      %p69 = por %p67, %p68
      %p71 = scmp.ne.s32.totalorder %s54, %s70
      %p72 = scmp.eq.s32.totalorder %s20, 0
      %p73 = por %p71, %p72
      %s74 = ssub.s32 %s14, %s21
      %p75 = scmp.eq.s32.totalorder %s74, 0
      %s77 = sadd.s32 %s76, 1
      %s78 = scalar_select %p75, %s76, %s77
      %p81 = pneg %p75
      %p82 = scmp.eq.s32.totalorder %s14, 1
      %p83 = por %p81, %p82
      %p84 = scmp.ne.s32.totalorder %s76, %s79
      %p85 = scmp.eq.s32.totalorder %s14, 0
      %p86 = por %p84, %p85
      %p87 = scmp.ne.s32.totalorder %s76, %s79
      %p88 = scmp.eq.s32.totalorder %s19, 1
      %p89 = por %p87, %p88
      %p90 = scmp.ne.s32.totalorder %s79, %s80
      %p91 = scmp.eq.s32.totalorder %s19, 0
      %p92 = por %p90, %p91
      %p93 = scmp.ne.s32.totalorder %s79, %s80
      %p94 = scmp.eq.s32.totalorder %s20, 1
      %p95 = por %p93, %p94
      %p97 = scmp.ne.s32.totalorder %s80, %s96
      %p98 = scmp.eq.s32.totalorder %s20, 0
      %p99 = por %p97, %p98
      %p100 = scmp.le.s32.totalorder 1, %s14
      %p101 = scmp.lt.s32.totalorder %s14, 3
      %p102 = pnand %p100, %p101
      %p103 = pneg %p102
      // Predicated region
      $region9: #{tpu_custom_call.1} parent=5 // pred_check
        _
      $region10: #{tpu_custom_call.1} parent=5 // pred_check_branch
        %105 = sbr.rel (%p102) target = $region12
      $region11: #{tpu_custom_call.1} parent=5 // pred_region
        %s106 = ssub.s32 %s14, 1
      $region12: #{tpu_custom_call.1} parent=5 // pred_fallthru
        _
      %p107 = scmp.lt.s32.totalorder %s14, 2
      // Predicated region
      $region13: #{tpu_custom_call.1} parent=5 // pred_check
        %p108 = pneg %p107
      $region14: #{tpu_custom_call.1} parent=5 // pred_check_branch
        %110 = sbr.rel (%p108) target = $region16
      $region15: #{tpu_custom_call.1} parent=5 // pred_region
        // Predicated region
        $region17: #{tpu_custom_call.1} parent=15 // pred_check
          %p111 = pneg %p34
        $region18: #{tpu_custom_call.1} parent=15 // pred_check_branch
          %113 = sbr.rel (%p111) target = $region20
        $region19: #{tpu_custom_call.1} parent=15 // pred_region
          %s114 = sand.u32 %s24, 1
          %s115 = scalar_lea.sflag [#allocation3], %s114
          %s116 = sand.u32 %s24, 1
          %s117 = smul.addr %s116, 16
          %s118 = scalar_lea.vmem [#allocation2], %s117
          %s120 = ssub.s32 256, 256
          %121 = vsyncadd %s115, %s120
          %s122 = smul.addr %s14, 128
          %s123 = scalar_lea.hbm %s0, %s122
          %s124 = sshll.u32 %s118, 4
          %s125 = int_to_ptr.vmem [resolvable:$true] %s124
          %130 = dma.hbm_to_vmem [thread:$0]  %s123, 256, %s125, %s115, 256, 128, 8
        $region20: #{tpu_custom_call.1} parent=15 // pred_fallthru
          _
        // Predicated region
        $region21: #{tpu_custom_call.1} parent=15 // pred_check
          %p131 = pneg %p60
        $region22: #{tpu_custom_call.1} parent=15 // pred_check_branch
          %133 = sbr.rel (%p131) target = $region24
        $region23: #{tpu_custom_call.1} parent=15 // pred_region
          %p134 = scmp.lt.s32.totalorder %s14, 1
          %s135 = scalar_select %p134, %s14, 1
          %s136 = scalar_lea.vmem %s1, %s135
        $region24: #{tpu_custom_call.1} parent=15 // pred_fallthru
          _
      $region16: #{tpu_custom_call.1} parent=5 // pred_fallthru
        _
      %p137 = scmp.le.s32.totalorder 1, %s14
      %p138 = scmp.lt.s32.totalorder %s14, 3
      %p139 = pnand %p137, %p138
      %p140 = pneg %p139
      // Predicated region
      $region25: #{tpu_custom_call.1} parent=5 // pred_check
        _
      $region26: #{tpu_custom_call.1} parent=5 // pred_check_branch
        %142 = sbr.rel (%p139) target = $region28
      $region27: #{tpu_custom_call.1} parent=5 // pred_region
        %s143 = ssub.s32 %s14, 1
        %s144 = sand.u32 %s27, 1
        %s145 = scalar_lea.sflag [#allocation3], %s144
        %s146 = sand.u32 %s27, 1
        %s147 = smul.addr %s146, 16
        %s148 = scalar_lea.vmem [#allocation2], %s147
        // Predicated region
        $region29: #{tpu_custom_call.1} parent=27 // pred_check
          %p149 = pneg %p40
        $region30: #{tpu_custom_call.1} parent=27 // pred_check_branch
          %151 = sbr.rel (%p149) target = $region32
        $region31: #{tpu_custom_call.1} parent=27 // pred_region
          %152 = dma.done %s145, 256
        $region32: #{tpu_custom_call.1} parent=27 // pred_fallthru
          _
        %s153 = sand.u32 %s27, 1
        %s154 = scalar_lea.sflag [#allocation3], %s153
        %s155 = sand.u32 %s27, 1
        %s156 = smul.addr %s155, 16
        %s157 = scalar_lea.vmem [#allocation2], %s156
        %p158 = pneg %p40
        %p159 = pneg %p37
        %p160 = scmp.lt.s32.totalorder %s19, 1
        %s161 = scalar_select %p160, %s19, 1
        %s162 = scalar_lea.vmem %s1, %s161
        %p163 = pneg %p66
        %p164 = pneg %p63
        %p165 = pneg %p92
        %p166 = pneg %p89
        %s167 = sand.u32 %s79, 1
        %s168 = scalar_lea.sflag [#allocation4], %s167
        %s169 = sand.u32 %s79, 1
        %s170 = scalar_lea.vmem [#allocation5], %s169
        %p171 = scmp.lt.s32.totalorder %s19, 1
        %s172 = scalar_select %p171, %s19, 1
        %s173 = scalar_lea.vmem %s1, %s172
        %v174 = vld [vmem:[%s148] sm:$0xff]
        %v175 = vld [vmem:[%s148 + $0x8] sm:$0x3]
        %v176 = vld [vmem:[%s173] sm:$0x1]
        %vm177 = vcmask 1041408
        %v178 = vsel %vm177, %v175, -inf
        %v179 = vmax.f32 %v174, %v178
        %v180 = vrot.slane %v179, 4
        %v181 = vmax.f32 %v179, %v180
        %v182 = vrot.slane %v181, 2
        %v183 = vmax.f32 %v181, %v182
        %v184 = vrot.slane %v183, 1
        %v185 = vmax.f32 %v183, %v184
        %v186 = vsub.f32 %v174, %v185
        %v187 = vsub.f32 %v175, %v185
        %v188 = vmul.f32 %v186, 1.442695
        %v189 = vpow.pop %v188
        %v190 = vmul.f32 %v187, 1.442695
        %v191 = vpow.pop %v190
        %v192 = vsel %vm177, %v191, 0.0
        %v193 = vadd.f32 %v189, %v192
        %v194 = vrot.slane %v193, 4
        %v195 = vadd.f32 %v193, %v194
        %v196 = vrot.slane %v195, 2
        %v197 = vadd.f32 %v195, %v196
        %v198 = vrot.slane %v197, 1
        %v199 = vadd.f32 %v197, %v198
        %v200 = vlog2.pop %v199
        %v201 = vmul.f32 %v200, 0.6931472
        %v202 = vadd.f32 %v185, %v201
        %v203 = vlaneseq
        %v204 = vshrl.u32 %v203, 7
        %v205 = vadd.s32 %v204, 8
        %v206 = vlaneseq
        %v207 = vshrl.u32 %v206, 7
        %v208 = vsub.s32 0, %v207
        %v209 = vrot.slane %v176, %v208
        %vm210 = vcmp.eq.s32.totalorder %v204, %v209
        %vm211 = vcmp.eq.s32.totalorder %v205, %v209
        %v212 = vsel %vm210, 1, 0
        %v213 = vsel %vm211, 1, 0
        %v214 = vcvt.s32.f32 %v212
        %v215 = vcvt.s32.f32 %v213
        %v216 = vmul.f32 %v214, %v174
        %v217 = vmul.f32 %v215, %v175
        %v218 = vsel %vm177, %v217, 0.0
        %v219 = vadd.f32 %v216, %v218
        %v220 = vrot.slane %v219, 4
        %v221 = vadd.f32 %v219, %v220
        %v222 = vrot.slane %v221, 2
        %v223 = vadd.f32 %v221, %v222
        %v224 = vrot.slane %v223, 1
        %v225 = vadd.f32 %v223, %v224
        %v226 = vsub.f32 %v225, %v202
        %v227 = vmax.f32 %v226, -16.118095
        %v228 = vmul.f32 %v227, 0.7
        %v229 = vmul.f32 %v228, 1.442695
        %v230 = vpow.pop %v229
        %v231 = vsub.f32 1.0, %v230
        %v232 = vmul.f32 %v231, 1.4285715
        %v233 = vlaneseq
        %v234 = vand.u32 %v233, 127
        %s235 = smul.u32 %s19, 128
        %v236 = vstv %s235
        %v237 = vadd.s32 %v234, %v236
        %vm238 = vcmp.lt.s32.totalorder %v237, 200
        %v239 = vsel %vm238, %v232, 0.0
        %240 = vadd.xlane.f32.xlu0 %v239
        %v241 = vpop.xlane.xlu0 %240
        %vm242 = vcmp.eq.s32.totalorder %v234, 0
        %v243 = vsel %vm242, %v241, 0.0
        %244 = vst [vmem:[%s170] sm:$0x1] %v243
        %s245 = sand.u32 %s79, 1
        %s246 = scalar_lea.sflag [#allocation4], %s245
        %s247 = sand.u32 %s79, 1
        %s248 = scalar_lea.vmem [#allocation5], %s247
        // Predicated region
        $region33: #{tpu_custom_call.1} parent=27 // pred_check
          %p249 = pneg %p89
        $region34: #{tpu_custom_call.1} parent=27 // pred_check_branch
          %251 = sbr.rel (%p249) target = $region36
        $region35: #{tpu_custom_call.1} parent=27 // pred_region
          %s253 = ssub.s32 16, 16
          %254 = vsyncadd %s246, %s253
          %s255 = smul.addr %s19, 16
          %s256 = scalar_lea.hbm %s2, %s255
          %s258 = sshll.u32 %s248, 4
          %s259 = int_to_ptr.vmem [resolvable:$true] %s258
          %261 = dma.vmem_to_hbm [thread:$0]  %s259, 16, %s256, %s246
        $region36: #{tpu_custom_call.1} parent=27 // pred_fallthru
          _
      $region28: #{tpu_custom_call.1} parent=5 // pred_fallthru
        _
      %p262 = scmp.le.s32.totalorder 2, %s14
      // Predicated region
      $region37: #{tpu_custom_call.1} parent=5 // pred_check
        %p263 = pneg %p262
      $region38: #{tpu_custom_call.1} parent=5 // pred_check_branch
        %265 = sbr.rel (%p263) target = $region40
      $region39: #{tpu_custom_call.1} parent=5 // pred_region
        %s266 = ssub.s32 %s14, 2
        // Predicated region
        $region41: #{tpu_custom_call.1} parent=39 // pred_check
          %p267 = pneg %p95
        $region42: #{tpu_custom_call.1} parent=39 // pred_check_branch
          %269 = sbr.rel (%p267) target = $region44
        $region43: #{tpu_custom_call.1} parent=39 // pred_region
          %s270 = sand.u32 %s80, 1
          %s271 = scalar_lea.sflag [#allocation4], %s270
          %s272 = sand.u32 %s80, 1
          %s273 = scalar_lea.vmem [#allocation5], %s272
          %274 = dma.done %s271, 16
        $region44: #{tpu_custom_call.1} parent=39 // pred_fallthru
          _
      $region40: #{tpu_custom_call.1} parent=5 // pred_fallthru
        _
    $region6: #{tpu_custom_call.1} parent=1 // loop_footer
      %s18 = sadd.s32 1, %s14
    $region7: #{tpu_custom_call.1} parent=1 // loop_footer_branch
      %13 = sbr.rel target = $region3
    $region8: #{tpu_custom_call.1} parent=1 // loop_exit
      _
    %275 = vsyncpa [#allocation3], 1
    %s276 = scalar_lea.sflag [#allocation3], 1
    %277 = vsyncpa %s276, 1
    %278 = vsyncpa [#allocation4], 1
    %s279 = scalar_lea.sflag [#allocation4], 1
    %280 = vsyncpa %s279, 1

</llo_original>
